<compile_context>
chip_gen: v7x
topology: tpu7x:2x2x1
jax: 0.10.0
libtpu: 0.0.40
codegen_flags: <defaults>
</compile_context>

<pallas_src>
import functools

import jax
import jax.numpy as jnp
from jax import lax
from jax.experimental import pallas as pl
from jax.experimental.pallas import tpu as pltpu
import numpy as np

EPS = 1e-6


def _round_up(x, m):
    return ((x + m - 1) // m) * m


def _vmem_capacity_bytes() -> int:
    """Physical VMEM of the current TPU generation (conservative fallback)."""
    try:
        info = pltpu.get_tpu_info()
        for name in ("vmem_capacity_bytes", "vmem_bytes", "vmem_size_bytes"):
            v = getattr(info, name, None)
            if v:
                return int(v)
    except Exception:
        pass
    return 64 * 1024 * 1024  # v7x per-TensorCore capacity: safe lower bound


def _compiler_params(dim_semantics, est_bytes, vmem_cap):
    kwargs = dict(dimension_semantics=dim_semantics)
    # Raise scoped VMEM only when the footprint may exceed the most conservative
    # per-generation scoped default (16 MiB on v5e); never request more than 85%
    # of the physical capacity (v7x: 64 MiB, v5e/v6e: 128 MiB).
    if est_bytes > 16 * 1024 * 1024:
        kwargs["vmem_limit_bytes"] = int(
            min(max(2 * est_bytes, 32 * 1024 * 1024), 0.85 * vmem_cap))
    return pltpu.CompilerParams(**kwargs)


# ----------------------------------------------------------------------------
# Path 1: single full-spatial block per image (grid = (B,))
# ----------------------------------------------------------------------------
def _attn_full_kernel(x_ref, w_ref, b_ref, o_ref, *, cq_pad, n_valid, matmul_dtype):
    """x_ref: (C, N_pad); w_ref: (R, C); b_ref: (R, 1); o_ref: (C, N_pad).

    Weight rows are stacked [q (Cq_p) | k (Cq_p) | gamma*v (C)]; padded q/k rows
    are zero (mathematically inert).
    """
    x = x_ref[...]
    n_pad = x.shape[-1]

    # Fused projection for Q, K, gamma*V: one MXU push, f32 accumulation.
    proj = jnp.dot(w_ref[...], x, preferred_element_type=jnp.float32) + b_ref[...]
    q = proj[:cq_pad]
    k = proj[cq_pad:2 * cq_pad]
    v = proj[2 * cq_pad:]

    # Channel-wise l2 normalisation per spatial position (EUP rsqrt).
    qn = q * lax.rsqrt(jnp.sum(q * q, axis=0, keepdims=True))
    kn = k * lax.rsqrt(jnp.sum(k * k, axis=0, keepdims=True))

    # Padded spatial columns must not contribute to any reduction over N.
    if n_pad != n_valid:
        valid = lax.broadcasted_iota(jnp.int32, (1, n_pad), 1) < n_valid
        kn_m = jnp.where(valid, kn, 0.0)
        v_m = jnp.where(valid, v, 0.0)
    else:
        kn_m, v_m = kn, v

    k_sum = jnp.sum(kn_m, axis=1, keepdims=True) + EPS                  # (Cq_p, 1)
    denom = jnp.float32(n_valid) + jnp.sum(qn * k_sum, axis=0, keepdims=True)
    tailor = pl.reciprocal(denom, approx=True)                          # (1, N_pad)
    value_sum = jnp.sum(v_m, axis=1, keepdims=True)                     # (C, 1)

    if matmul_dtype is not None:
        v_mm, kn_mm, qn_mm = (a.astype(matmul_dtype) for a in (v_m, kn_m, qn))
    else:
        v_mm, kn_mm, qn_mm = v_m, kn_m, qn

    # matrix_t[c, m] = sum_n V[c, n] * Kn[m, n]   (canonical MXU orientation)
    matrix_t = lax.dot_general(v_mm, kn_mm, (((1,), (1,)), ((), ())),
                               preferred_element_type=jnp.float32)      # (C, Cq_p)
    qm = jnp.dot(matrix_t.astype(qn_mm.dtype), qn_mm,
                 preferred_element_type=jnp.float32)                    # (C, N_pad)

    # gamma is already folded into V -> single epilogue multiply.
    o_ref[...] = ((value_sum + qm) * tailor).astype(o_ref.dtype)


# ----------------------------------------------------------------------------
# Path 2 / pass 1: accumulate k_sum, value_sum, V.Kn^T over spatial tiles
# ----------------------------------------------------------------------------
def _attn_stats_kernel(x_ref, w_ref, b_ref, ksum_ref, vsum_ref, mat_ref, *,
                       cq_pad, n_valid, tile_n, masked, matmul_dtype):
    nt = pl.program_id(1)

    @pl.when(nt == 0)
    def _():
        ksum_ref[...] = jnp.zeros_like(ksum_ref)
        vsum_ref[...] = jnp.zeros_like(vsum_ref)
        mat_ref[...] = jnp.zeros_like(mat_ref)

    x = x_ref[...]                                                      # (C, tile_n)
    proj = jnp.dot(w_ref[...], x, preferred_element_type=jnp.float32) + b_ref[...]
    k = proj[:cq_pad]
    v = proj[cq_pad:]

    kn = k * lax.rsqrt(jnp.sum(k * k, axis=0, keepdims=True))

    if masked:
        col = nt * tile_n + lax.broadcasted_iota(jnp.int32, (1, tile_n), 1)
        valid = col < n_valid
        kn = jnp.where(valid, kn, 0.0)
        v = jnp.where(valid, v, 0.0)

    ksum_ref[...] += jnp.sum(kn, axis=1, keepdims=True)                 # (Cq_p, 1)
    vsum_ref[...] += jnp.sum(v, axis=1, keepdims=True)                  # (C, 1)

    if matmul_dtype is not None:
        v = v.astype(matmul_dtype)
        kn = kn.astype(matmul_dtype)
    mat_ref[...] += lax.dot_general(v, kn, (((1,), (1,)), ((), ())),
                                    preferred_element_type=jnp.float32)  # (C, Cq_p)


# ----------------------------------------------------------------------------
# Path 2 / pass 2: per-tile Q projection + finalize (fully parallel grid)
# ----------------------------------------------------------------------------
def _attn_apply_kernel(x_ref, wq_ref, bq_ref, ksum_ref, vsum_ref, mat_ref, o_ref, *,
                       n_valid, matmul_dtype):
    x = x_ref[...]                                                      # (C, tile_n)
    q = jnp.dot(wq_ref[...], x, preferred_element_type=jnp.float32) + bq_ref[...]
    qn = q * lax.rsqrt(jnp.sum(q * q, axis=0, keepdims=True))           # (Cq_p, tile_n)

    k_sum = ksum_ref[...] + EPS                                         # (Cq_p, 1)
    denom = jnp.float32(n_valid) + jnp.sum(qn * k_sum, axis=0, keepdims=True)
    tailor = pl.reciprocal(denom, approx=True)                          # (1, tile_n)

    mat = mat_ref[...]                                                  # (C, Cq_p)
    if matmul_dtype is not None:
        qn = qn.astype(matmul_dtype)
        mat = mat.astype(matmul_dtype)
    qm = jnp.dot(mat, qn, preferred_element_type=jnp.float32)           # (C, tile_n)

    o_ref[...] = ((vsum_ref[...] + qm) * tailor).astype(o_ref.dtype)


# ----------------------------------------------------------------------------
# Wrapper
# ----------------------------------------------------------------------------
def attention_pallas(x, wq, bq, wk, bk, wv, bv, gamma, *,
                     mode="auto", tile_n=None, out_dtype=None, matmul_dtype=None):
    """Forward of the `Attention` module.

    x: (B, C, W, H).  Returns (B, C, H, W) exactly like the torch module (which
    flattens W*H and views the result back as (H, W)).

    mode: "auto" | "single" | "tiled".
    out_dtype: output dtype (defaults to x.dtype; pass bf16 to halve writeback).
    matmul_dtype: optional dtype (e.g. bf16) for the big-N MXU operands
      (f32 accumulation kept); useful on v6e/v7x for large images.
    """
    B, C, W, H = x.shape
    N = W * H
    Cq = wq.shape[0]
    Cq_p = max(8, _round_up(Cq, 8))           # sublane-aligned q/k channel count
    Rkv = Cq_p + C
    R = 2 * Cq_p + C

    if out_dtype is None:
        out_dtype = x.dtype
    x_item = jnp.dtype(x.dtype).itemsize
    out_item = jnp.dtype(out_dtype).itemsize
    vmem_cap = _vmem_capacity_bytes()

    # --- host-side parameter prep (tiny (O, C) tensors) -----------------------
    wq_p = jnp.zeros((Cq_p, C), jnp.float32).at[:Cq].set(wq)
    bq_p = jnp.zeros((Cq_p,), jnp.float32).at[:Cq].set(bq)
    wk_p = jnp.zeros((Cq_p, C), jnp.float32).at[:Cq].set(wk)
    bk_p = jnp.zeros((Cq_p,), jnp.float32).at[:Cq].set(bk)
    wv_g = wv * gamma[0]                      # gamma folded into V projection
    bv_g = bv * gamma[0]

    # --- path selection --------------------------------------------------------
    n128 = max(128, _round_up(N, 128))
    single_est = (2 * C * n128 * x_item                       # double-buffered x block
                  + 2 * C * n128 * out_item                   # double-buffered out block
                  + 2 * (R * C + R) * 4                       # weights + bias
                  + (R + 3 * Cq_p + 4 * C + 4) * n128 * 4)    # live f32 intermediates
    if mode == "auto":
        # Tile when the full-spatial block cannot fit comfortably, or when B == 1
        # and there are enough lanes to give both v7x TensorCores grid work in
        # pass 2 (pass 1's reduction axis stays sequential).
        use_tiled = (single_est > 0.6 * vmem_cap) or (B == 1 and n128 >= 512)
    else:
        use_tiled = (mode == "tiled")

    xf = x.reshape(B, C, N)   # no dtype round-trip: keep the incoming dtype

    if not use_tiled:
        # ------------------------- single full-spatial path --------------------
        n_pad = n128
        if n_pad != N:
            xf = jnp.pad(xf, ((0, 0), (0, 0), (0, n_pad - N)))  # lane-dense stores
        w_all = jnp.concatenate([wq_p, wk_p, wv_g], axis=0).astype(xf.dtype)    # (R, C)
        b_all = jnp.concatenate([bq_p, bk_p, bv_g], axis=0)[:, None].astype(jnp.float32)

        kernel = functools.partial(_attn_full_kernel, cq_pad=Cq_p, n_valid=N,
                                   matmul_dtype=matmul_dtype)
        out = pl.pallas_call(
            kernel,
            out_shape=jax.ShapeDtypeStruct((B, C, n_pad), out_dtype),
            grid_spec=pltpu.PrefetchScalarGridSpec(
                num_scalar_prefetch=0,
                grid=(B,),
                in_specs=[
                    pl.BlockSpec((None, C, n_pad), lambda b: (b, 0, 0)),   # x
                    pl.BlockSpec((R, C), lambda b: (0, 0)),                # stacked W
                    pl.BlockSpec((R, 1), lambda b: (0, 0)),                # stacked b
                ],
                out_specs=pl.BlockSpec((None, C, n_pad), lambda b: (b, 0, 0)),
            ),
            compiler_params=_compiler_params(("parallel",), single_est, vmem_cap),
        )(xf, w_all, b_all)
    else:
        # --------------------------- two-pass tiled path ------------------------
        if tile_n is None:
            tile_n = 128
            for cand in (2048, 1024, 512, 256, 128):
                per_tile = (2 * C * cand * (x_item + out_item)
                            + (Rkv + 3 * Cq_p + 4 * C + 4) * cand * 4)
                if per_tile <= 0.25 * vmem_cap or cand == 128:
                    tile_n = cand
                    break
        tile_n = max(128, _round_up(int(tile_n), 128))
        tile_n = min(tile_n, n128)
        n_pad = _round_up(N, tile_n)
        num_tiles = n_pad // tile_n
        if n_pad != N:
            xf = jnp.pad(xf, ((0, 0), (0, 0), (0, n_pad - N)))

        w_kv = jnp.concatenate([wk_p, wv_g], axis=0).astype(xf.dtype)     # (Rkv, C)
        b_kv = jnp.concatenate([bk_p, bv_g], axis=0)[:, None].astype(jnp.float32)
        w_q = wq_p.astype(xf.dtype)                                        # (Cq_p, C)
        b_q = bq_p[:, None].astype(jnp.float32)

        tile_est = (2 * C * tile_n * (x_item + out_item)
                    + 2 * (Rkv * C + Rkv) * 4
                    + (Rkv + 3 * Cq_p + 4 * C + 4) * tile_n * 4
                    + 2 * (Cq_p + C + C * Cq_p) * 4)

        # ---- pass 1: stream tiles, accumulate k_sum / value_sum / V.Kn^T -------
        stats_kernel = functools.partial(
            _attn_stats_kernel, cq_pad=Cq_p, n_valid=N, tile_n=tile_n,
            masked=(n_pad != N), matmul_dtype=matmul_dtype)
        ksum, vsum, mat_t = pl.pallas_call(
            stats_kernel,
            out_shape=(jax.ShapeDtypeStruct((B, Cq_p, 1), jnp.float32),
                       jax.ShapeDtypeStruct((B, C, 1), jnp.float32),
                       jax.ShapeDtypeStruct((B, C, Cq_p), jnp.float32)),
            grid_spec=pltpu.PrefetchScalarGridSpec(
                num_scalar_prefetch=0,
                grid=(B, num_tiles),
                in_specs=[
                    pl.BlockSpec((None, C, tile_n), lambda b, t: (b, 0, t)),
                    pl.BlockSpec((Rkv, C), lambda b, t: (0, 0)),
                    pl.BlockSpec((Rkv, 1), lambda b, t: (0, 0)),
                ],
                out_specs=[
                    pl.BlockSpec((None, Cq_p, 1), lambda b, t: (b, 0, 0)),
                    pl.BlockSpec((None, C, 1), lambda b, t: (b, 0, 0)),
                    pl.BlockSpec((None, C, Cq_p), lambda b, t: (b, 0, 0)),
                ],
            ),
            compiler_params=_compiler_params(("parallel", "arbitrary"),
                                             tile_est, vmem_cap),
        )(xf, w_kv, b_kv)

        # ---- pass 2: re-stream tiles, finalize, write lane-dense output tiles --
        apply_kernel = functools.partial(_attn_apply_kernel, n_valid=N,
                                         matmul_dtype=matmul_dtype)
        out = pl.pallas_call(
            apply_kernel,
            out_shape=jax.ShapeDtypeStruct((B, C, n_pad), out_dtype),
            grid_spec=pltpu.PrefetchScalarGridSpec(
                num_scalar_prefetch=0,
                grid=(B, num_tiles),
                in_specs=[
                    pl.BlockSpec((None, C, tile_n), lambda b, t: (b, 0, t)),
                    pl.BlockSpec((Cq_p, C), lambda b, t: (0, 0)),
                    pl.BlockSpec((Cq_p, 1), lambda b, t: (0, 0)),
                    pl.BlockSpec((None, Cq_p, 1), lambda b, t: (b, 0, 0)),
                    pl.BlockSpec((None, C, 1), lambda b, t: (b, 0, 0)),
                    pl.BlockSpec((None, C, Cq_p), lambda b, t: (b, 0, 0)),
                ],
                out_specs=pl.BlockSpec((None, C, tile_n), lambda b, t: (b, 0, t)),
            ),
            compiler_params=_compiler_params(("parallel", "parallel"),
                                             tile_est, vmem_cap),
        )(xf, w_q, b_q, ksum, vsum, mat_t)

    if n_pad != N:
        out = out[:, :, :N]
    # torch does weight_value.view(B, C, height, width)
    return out.reshape(B, C, H, W)


# ----------------------------------------------------------------------------
# Pure-JAX mirror of the PyTorch forward, for verification
# ----------------------------------------------------------------------------
def attention_ref(x, wq, bq, wk, bk, wv, bv, gamma):
    B, C, W, H = x.shape
    N = W * H
    xf = x.reshape(B, C, N).astype(jnp.float32)
    q = jnp.einsum('oc,bcn->bon', wq, xf) + bq[None, :, None]
    k = jnp.einsum('oc,bcn->bon', wk, xf) + bk[None, :, None]
    v = jnp.einsum('oc,bcn->bon', wv, xf) + bv[None, :, None]
    q = q / jnp.linalg.norm(q, axis=-2, keepdims=True)
    k = k / jnp.linalg.norm(k, axis=-2, keepdims=True)
    qp = jnp.transpose(q, (0, 2, 1))                                    # (B, N, Cq)
    tailor = 1.0 / (N + jnp.einsum('bnc,bc->bn', qp, jnp.sum(k, axis=-1) + EPS))
    value_sum = jnp.sum(v, axis=-1)                                     # (B, C)
    matrix = jnp.einsum('bmn,bcn->bmc', k, v)                           # (B, Cq, C)
    matrix_sum = value_sum[:, :, None] + jnp.einsum('bnm,bmc->bcn', qp, matrix)
    weight_value = matrix_sum * tailor[:, None, :]
    return gamma[0] * weight_value.reshape(B, C, H, W)


if __name__ == "__main__":
    key = jax.random.PRNGKey(0)
    ks = jax.random.split(key, 8)

    C, scale = 32, 8
    Cq = C // scale
    wq = 0.1 * jax.random.normal(ks[1], (Cq, C), dtype=jnp.float32)
    bq = 0.1 * jax.random.normal(ks[2], (Cq,), dtype=jnp.float32)
    wk = 0.1 * jax.random.normal(ks[3], (Cq, C), dtype=jnp.float32)
    bk = 0.1 * jax.random.normal(ks[4], (Cq,), dtype=jnp.float32)
    wv = 0.1 * jax.random.normal(ks[5], (C, C), dtype=jnp.float32)
    bv = 0.1 * jax.random.normal(ks[6], (C,), dtype=jnp.float32)
    # Module init is torch.zeros(1); use a non-zero value so the check is non-trivial.
    gamma = jnp.array([0.5], dtype=jnp.float32)
    params = (wq, bq, wk, bk, wv, bv, gamma)

    # Tolerance accounts for the approximate EUP reciprocal used for `tailor`
    # (intentional: documented for downstream consumers).
    tol = dict(rtol=5e-3, atol=2e-4)

    # 1) Main case: B=2, 16x16 image -> single full-spatial block per image.
    x = jax.random.normal(ks[0], (2, C, 16, 16), dtype=jnp.float32)
    out = jax.block_until_ready(attention_pallas(x, *params))
    assert out.shape == (2, C, 16, 16)
    np.testing.assert_allclose(np.asarray(out),
                               np.asarray(attention_ref(x, *params)), **tol)

    # 2) Two-pass N-tiled path (structure used when the full-spatial block cannot
    #    fit VMEM, e.g. large images on v7x), forced here with a small tile.
    #    Also exercises B=1 and a non-128-multiple N (padding + masking).
    x1 = jax.random.normal(ks[7], (1, C, 16, 10), dtype=jnp.float32)   # N = 160
    out_t = jax.block_until_ready(
        attention_pallas(x1, *params, mode="tiled", tile_n=128))
    assert out_t.shape == (1, C, 10, 16)
    np.testing.assert_allclose(np.asarray(out_t),
                               np.asarray(attention_ref(x1, *params)), **tol)

    # 3) Single-pass path with lane padding/masking (N not a multiple of 128).
    out_s = jax.block_until_ready(attention_pallas(x1, *params, mode="single"))
    np.testing.assert_allclose(np.asarray(out_s),
                               np.asarray(attention_ref(x1, *params)), **tol)

    print("KERNEL_OK")
</pallas_src>

<mosaic_0001>
module attributes {stable_mosaic.version = 11 : i64} {
  func.func @_attn_full_kernel(%arg0: i32, %arg1: memref<1x32x256xf32, #tpu.memory_space<vmem>>, %arg2: memref<48x32xf32, #tpu.memory_space<vmem>>, %arg3: memref<48x1xf32, #tpu.memory_space<vmem>>, %arg4: memref<1x32x256xf32, #tpu.memory_space<vmem>>) attributes {dimension_semantics = [#tpu.dimension_semantics<parallel>], iteration_bounds = array<i64: 2>, scalar_prefetch = 0 : i64, scratch_operands = 0 : i64, tpu.core_type = #tpu.core_type<tc>, window_params = [{transform_indices = @transform_0, window_bounds = array<i64: 1, 32, 256>}, {pipeline_mode = #tpu.pipeline_mode<synchronous>, transform_indices = @transform_1, window_bounds = array<i64: 48, 32>}, {pipeline_mode = #tpu.pipeline_mode<synchronous>, transform_indices = @transform_2, window_bounds = array<i64: 48, 1>}, {transform_indices = @transform_3, window_bounds = array<i64: 1, 32, 256>}]} {
    %c0 = arith.constant 0 : index
    %c0_0 = arith.constant 0 : index
    %c0_1 = arith.constant 0 : index
    %0 = vector.load %arg1[%c0, %c0_0, %c0_1] : memref<1x32x256xf32, #tpu.memory_space<vmem>>, vector<1x32x256xf32>
    %1 = vector.shape_cast %0 : vector<1x32x256xf32> to vector<32x256xf32>
    %c0_2 = arith.constant 0 : index
    %c0_3 = arith.constant 0 : index
    %2 = vector.load %arg2[%c0_2, %c0_3] : memref<48x32xf32, #tpu.memory_space<vmem>>, vector<48x32xf32>
    %cst = arith.constant dense<0.000000e+00> : vector<48x256xf32>
    %3 = tpu.matmul %2, %1, %cst {dimension_numbers = #tpu.dot_dimension_numbers<[1], [0], [0], [1], [0, 0, 1, 1], [], []>} : vector<48x32xf32>, vector<32x256xf32>, vector<48x256xf32> -> vector<48x256xf32>
    %c0_4 = arith.constant 0 : index
    %c0_5 = arith.constant 0 : index
    %4 = vector.load %arg3[%c0_4, %c0_5] : memref<48x1xf32, #tpu.memory_space<vmem>>, vector<48x1xf32>
    %5 = vector.broadcast %4 : vector<48x1xf32> to vector<48x256xf32>
    %6 = arith.addf %3, %5 : vector<48x256xf32>
    %7 = vector.extract_strided_slice %6 {offsets = [0, 0], sizes = [8, 256], strides = [1, 1]} : vector<48x256xf32> to vector<8x256xf32>
    %8 = vector.extract_strided_slice %6 {offsets = [8, 0], sizes = [8, 256], strides = [1, 1]} : vector<48x256xf32> to vector<8x256xf32>
    %9 = vector.extract_strided_slice %6 {offsets = [16, 0], sizes = [32, 256], strides = [1, 1]} : vector<48x256xf32> to vector<32x256xf32>
    %10 = arith.mulf %7, %7 : vector<8x256xf32>
    %cst_6 = arith.constant dense<0.000000e+00> : vector<256xf32>
    %11 = vector.multi_reduction <add>, %10, %cst_6 [0] : vector<8x256xf32> to vector<256xf32>
    %12 = vector.shape_cast %11 : vector<256xf32> to vector<1x256xf32>
    %13 = math.rsqrt %12 : vector<1x256xf32>
    %14 = vector.broadcast %13 : vector<1x256xf32> to vector<8x256xf32>
    %15 = arith.mulf %7, %14 : vector<8x256xf32>
    %16 = arith.mulf %8, %8 : vector<8x256xf32>
    %cst_7 = arith.constant dense<0.000000e+00> : vector<256xf32>
    %17 = vector.multi_reduction <add>, %16, %cst_7 [0] : vector<8x256xf32> to vector<256xf32>
    %18 = vector.shape_cast %17 : vector<256xf32> to vector<1x256xf32>
    %19 = math.rsqrt %18 : vector<1x256xf32>
    %20 = vector.broadcast %19 : vector<1x256xf32> to vector<8x256xf32>
    %21 = arith.mulf %8, %20 : vector<8x256xf32>
    %cst_8 = arith.constant dense<0.000000e+00> : vector<8xf32>
    %22 = vector.multi_reduction <add>, %21, %cst_8 [1] : vector<8x256xf32> to vector<8xf32>
    %23 = vector.shape_cast %22 : vector<8xf32> to vector<8x1xf32>
    %cst_9 = arith.constant 9.99999997E-7 : f32
    %24 = vector.broadcast %cst_9 : f32 to vector<8x1xf32>
    %25 = arith.addf %23, %24 : vector<8x1xf32>
    %26 = vector.broadcast %25 : vector<8x1xf32> to vector<8x256xf32>
    %27 = arith.mulf %15, %26 : vector<8x256xf32>
    %cst_10 = arith.constant dense<0.000000e+00> : vector<256xf32>
    %28 = vector.multi_reduction <add>, %27, %cst_10 [0] : vector<8x256xf32> to vector<256xf32>
    %29 = vector.shape_cast %28 : vector<256xf32> to vector<1x256xf32>
    %cst_11 = arith.constant 2.560000e+02 : f32
    %30 = vector.broadcast %cst_11 : f32 to vector<1x256xf32>
    %31 = arith.addf %30, %29 : vector<1x256xf32>
    %32 = tpu.reciprocal %31 {approx = true} : vector<1x256xf32> -> vector<1x256xf32>
    %cst_12 = arith.constant dense<0.000000e+00> : vector<32xf32>
    %33 = vector.multi_reduction <add>, %9, %cst_12 [1] : vector<32x256xf32> to vector<32xf32>
    %34 = vector.shape_cast %33 : vector<32xf32> to vector<32x1xf32>
    %cst_13 = arith.constant dense<0.000000e+00> : vector<32x8xf32>
    %35 = tpu.matmul %9, %21, %cst_13 {dimension_numbers = #tpu.dot_dimension_numbers<[1], [1], [0], [0], [0, 0, 1, 0], [], []>} : vector<32x256xf32>, vector<8x256xf32>, vector<32x8xf32> -> vector<32x8xf32>
    %cst_14 = arith.constant dense<0.000000e+00> : vector<32x256xf32>
    %36 = tpu.matmul %35, %15, %cst_14 {dimension_numbers = #tpu.dot_dimension_numbers<[1], [0], [0], [1], [0, 0, 1, 1], [], []>} : vector<32x8xf32>, vector<8x256xf32>, vector<32x256xf32> -> vector<32x256xf32>
    %37 = vector.broadcast %34 : vector<32x1xf32> to vector<32x256xf32>
    %38 = arith.addf %37, %36 : vector<32x256xf32>
    %39 = vector.broadcast %32 : vector<1x256xf32> to vector<32x256xf32>
    %40 = arith.mulf %38, %39 : vector<32x256xf32>
    %c0_15 = arith.constant 0 : index
    %c0_16 = arith.constant 0 : index
    %c0_17 = arith.constant 0 : index
    %41 = vector.load %arg4[%c0_15, %c0_16, %c0_17] : memref<1x32x256xf32, #tpu.memory_space<vmem>>, vector<1x32x256xf32>
    %42 = vector.shape_cast %41 : vector<1x32x256xf32> to vector<32x256xf32>
    %43 = vector.shape_cast %40 : vector<32x256xf32> to vector<1x32x256xf32>
    tpu.vector_store %arg4[%c0_15, %c0_16, %c0_17], %43 {strides = array<i32>} : memref<1x32x256xf32, #tpu.memory_space<vmem>>, vector<1x32x256xf32>,
    return
  }
  func.func @transform_0(%arg0: i32) -> (i32, i32, i32) {
    %c0_i32 = arith.constant 0 : i32
    %c0_i32_0 = arith.constant 0 : i32
    %c0_i32_1 = arith.constant 0 : i32
    return %arg0, %c0_i32, %c0_i32_0 : i32, i32, i32
  }
  func.func @transform_1(%arg0: i32) -> (i32, i32) {
    %c0_i32 = arith.constant 0 : i32
    %c0_i32_0 = arith.constant 0 : i32
    %c0_i32_1 = arith.constant 0 : i32
    return %c0_i32, %c0_i32_0 : i32, i32
  }
  func.func @transform_2(%arg0: i32) -> (i32, i32) {
    %c0_i32 = arith.constant 0 : i32
    %c0_i32_0 = arith.constant 0 : i32
    %c0_i32_1 = arith.constant 0 : i32
    return %c0_i32, %c0_i32_0 : i32, i32
  }
  func.func @transform_3(%arg0: i32) -> (i32, i32, i32) {
    %c0_i32 = arith.constant 0 : i32
    %c0_i32_0 = arith.constant 0 : i32
    %c0_i32_1 = arith.constant 0 : i32
    return %arg0, %c0_i32, %c0_i32_0 : i32, i32, i32
  }
}

</mosaic_0001>

<llo_original>
// kernel: tpu_custom_call.1
$region0: #{tpu_custom_call.1}
  #allocation0 [shape = 'u32[]', space=smem, size = 0x4, offset = 0x4, fixed_abs, tag = 'smem constant byte address 0x4 - core index']
  #allocation1 [shape = 'u32[144,128]{1,0:T(1,128)}', space=vmem, size = 0x12000, scoped, tag = 'internal scratch']
  %s0 = inlined_call_operand.vmem [shape: f32[2,32,256], index: 0, kind: input, shape index: {}]
  %s1 = inlined_call_operand.vmem [shape: f32[48,32], index: 1, kind: input, shape index: {}]
  %s2 = inlined_call_operand.vmem [shape: f32[48,1], index: 2, kind: input, shape index: {}]
  %s3 = inlined_call_operand.hbm [shape: f32[2,32,256], index: 3, kind: output, shape index: {}]
  %s4 = sld [smem:[#allocation0]]
  $region45: #{tpu_custom_call.1} parent=0
    _
  %s6 = ssub.s32 1, %s4
  %s7 = scalar_select 0, %s6, %s4
  $region1: #{tpu_custom_call.1} parent=0
    #allocation2 [shape = 'u8[65536]{0}', space=vmem, size = 0x10000, scoped, tag = 'output window, operand 0']
    #allocation3 [shape = 's32[2]{0}', space=sflag, size = 0x8, scoped, tag = 'scoped memory for tpu_custom_call.1']
    %8 = vsyncpa [#allocation3], 0
    %s9 = scalar_lea.sflag [#allocation3], 1
    %10 = vsyncpa %s9, 0
    loop: start=0, step=1, limit=4
    $region2: #{tpu_custom_call.1} parent=1 // loop_pre_header
      _
    $region3: #{tpu_custom_call.1} parent=1 // loop_header
      %s12 = sphi 0, %s16
      %p13 = scmp.ge.s32.totalorder %s12, 4
      %s22 = sphi 0, %s24
      %s25 = sphi 0, %s22
      %s26 = sphi 0, %s25
      %s42 = sphi 0, %s26
      %s46 = sphi 0, %s46
      %s48 = sphi 0, %s46
      %s49 = sphi 0, %s48
      %s63 = sphi 0, %s49
      %s67 = sphi 0, %s67
      %s69 = sphi 0, %s67
      %s70 = sphi 0, %s69
      %s84 = sphi 0, %s70
      %s90 = sphi 0, %s92
      %s93 = sphi 0, %s90
      %s94 = sphi 0, %s93
      %s110 = sphi 0, %s94
    $region4: #{tpu_custom_call.1} parent=1 // loop_header_branch
      %15 = sbr.rel (%p13) target = $region8
    $region5: #{tpu_custom_call.1} parent=1 // loop_body
      %s17 = ssub.s32 %s12, 1
      %s18 = ssub.s32 %s12, 2
      %s19 = sadd.s32 %s12, 1
      %s20 = ssub.s32 %s12, %s19
      %p21 = scmp.eq.s32.totalorder %s20, 0
      %s23 = sadd.s32 %s22, 1
      %s24 = scalar_select %p21, %s22, %s23
      %p27 = pneg %p21
      %p28 = scmp.eq.s32.totalorder %s12, 1
      %p29 = por %p27, %p28
      %p30 = scmp.ne.s32.totalorder %s22, %s25
      %p31 = scmp.eq.s32.totalorder %s12, 0
      %p32 = por %p30, %p31
      %p33 = scmp.ne.s32.totalorder %s22, %s25
      %p34 = scmp.eq.s32.totalorder %s17, 1
      %p35 = por %p33, %p34
      %p36 = scmp.ne.s32.totalorder %s25, %s26
      %p37 = scmp.eq.s32.totalorder %s17, 0
      %p38 = por %p36, %p37
      %p39 = scmp.ne.s32.totalorder %s25, %s26
      %p40 = scmp.eq.s32.totalorder %s18, 1
      %p41 = por %p39, %p40
      %p43 = scmp.ne.s32.totalorder %s26, %s42
      %p44 = scmp.eq.s32.totalorder %s18, 0
      %p45 = por %p43, %p44
      %s47 = sadd.s32 %s46, 1
      %p50 = scmp.eq.s32.totalorder %s12, 1
      %p51 = scmp.ne.s32.totalorder %s46, %s48
      %p52 = scmp.eq.s32.totalorder %s12, 0
      %p53 = por %p51, %p52
      %p54 = scmp.ne.s32.totalorder %s46, %s48
      %p55 = scmp.eq.s32.totalorder %s17, 1
      %p56 = por %p54, %p55
      %p57 = scmp.ne.s32.totalorder %s48, %s49
      %p58 = scmp.eq.s32.totalorder %s17, 0
      %p59 = por %p57, %p58
      %p60 = scmp.ne.s32.totalorder %s48, %s49
      %p61 = scmp.eq.s32.totalorder %s18, 1
      %p62 = por %p60, %p61
      %p64 = scmp.ne.s32.totalorder %s49, %s63
      %p65 = scmp.eq.s32.totalorder %s18, 0
      %p66 = por %p64, %p65
      %s68 = sadd.s32 %s67, 1
      %p71 = scmp.eq.s32.totalorder %s12, 1
      %p72 = scmp.ne.s32.totalorder %s67, %s69
      %p73 = scmp.eq.s32.totalorder %s12, 0
      %p74 = por %p72, %p73
      %p75 = scmp.ne.s32.totalorder %s67, %s69
      %p76 = scmp.eq.s32.totalorder %s17, 1
      %p77 = por %p75, %p76
      %p78 = scmp.ne.s32.totalorder %s69, %s70
      %p79 = scmp.eq.s32.totalorder %s17, 0
      %p80 = por %p78, %p79
      %p81 = scmp.ne.s32.totalorder %s69, %s70
      %p82 = scmp.eq.s32.totalorder %s18, 1
      %p83 = por %p81, %p82
      %p85 = scmp.ne.s32.totalorder %s70, %s84
      %p86 = scmp.eq.s32.totalorder %s18, 0
      %p87 = por %p85, %p86
      %s88 = ssub.s32 %s12, %s19
      %p89 = scmp.eq.s32.totalorder %s88, 0
      %s91 = sadd.s32 %s90, 1
      %s92 = scalar_select %p89, %s90, %s91
      %p95 = pneg %p89
      %p96 = scmp.eq.s32.totalorder %s12, 1
      %p97 = por %p95, %p96
      %p98 = scmp.ne.s32.totalorder %s90, %s93
      %p99 = scmp.eq.s32.totalorder %s12, 0
      %p100 = por %p98, %p99
      %p101 = scmp.ne.s32.totalorder %s90, %s93
      %p102 = scmp.eq.s32.totalorder %s17, 1
      %p103 = por %p101, %p102
      %p104 = scmp.ne.s32.totalorder %s93, %s94
      %p105 = scmp.eq.s32.totalorder %s17, 0
      %p106 = por %p104, %p105
      %p107 = scmp.ne.s32.totalorder %s93, %s94
      %p108 = scmp.eq.s32.totalorder %s18, 1
      %p109 = por %p107, %p108
      %p111 = scmp.ne.s32.totalorder %s94, %s110
      %p112 = scmp.eq.s32.totalorder %s18, 0
      %p113 = por %p111, %p112
      %p114 = scmp.le.s32.totalorder 1, %s12
      %p115 = scmp.lt.s32.totalorder %s12, 3
      %p116 = pnand %p114, %p115
      %p117 = pneg %p116
      // Predicated region
      $region9: #{tpu_custom_call.1} parent=5 // pred_check
        _
      $region10: #{tpu_custom_call.1} parent=5 // pred_check_branch
        %119 = sbr.rel (%p116) target = $region12
      $region11: #{tpu_custom_call.1} parent=5 // pred_region
        %s120 = ssub.s32 %s12, 1
        // Predicated region
        $region13: #{tpu_custom_call.1} parent=11 // pred_check
          %p121 = pneg %p59
        $region14: #{tpu_custom_call.1} parent=11 // pred_check_branch
          %123 = sbr.rel (%p121) target = $region16
        $region15: #{tpu_custom_call.1} parent=11 // pred_region
          _
        $region16: #{tpu_custom_call.1} parent=11 // pred_fallthru
          _
        // Predicated region
        $region17: #{tpu_custom_call.1} parent=11 // pred_check
          %p124 = pneg %p80
        $region18: #{tpu_custom_call.1} parent=11 // pred_check_branch
          %126 = sbr.rel (%p124) target = $region20
        $region19: #{tpu_custom_call.1} parent=11 // pred_region
          _
        $region20: #{tpu_custom_call.1} parent=11 // pred_fallthru
          _
      $region12: #{tpu_custom_call.1} parent=5 // pred_fallthru
        _
      %p127 = scmp.lt.s32.totalorder %s12, 2
      // Predicated region
      $region21: #{tpu_custom_call.1} parent=5 // pred_check
        %p128 = pneg %p127
      $region22: #{tpu_custom_call.1} parent=5 // pred_check_branch
        %130 = sbr.rel (%p128) target = $region24
      $region23: #{tpu_custom_call.1} parent=5 // pred_region
        // Predicated region
        $region25: #{tpu_custom_call.1} parent=23 // pred_check
          %p131 = pneg %p32
        $region26: #{tpu_custom_call.1} parent=23 // pred_check_branch
          %133 = sbr.rel (%p131) target = $region28
        $region27: #{tpu_custom_call.1} parent=23 // pred_region
          %p134 = scmp.lt.s32.totalorder %s12, 1
          %s135 = scalar_select %p134, %s12, 1
          %s136 = smul.addr %s135, 8
          %s137 = smul.addr %s136, 8
          %s138 = scalar_lea.vmem %s0, %s137
        $region28: #{tpu_custom_call.1} parent=23 // pred_fallthru
          _
      $region24: #{tpu_custom_call.1} parent=5 // pred_fallthru
        _
      %p139 = scmp.le.s32.totalorder 1, %s12
      %p140 = scmp.lt.s32.totalorder %s12, 3
      %p141 = pnand %p139, %p140
      %p142 = pneg %p141
      // Predicated region
      $region29: #{tpu_custom_call.1} parent=5 // pred_check
        _
      $region30: #{tpu_custom_call.1} parent=5 // pred_check_branch
        %144 = sbr.rel (%p141) target = $region32
      $region31: #{tpu_custom_call.1} parent=5 // pred_region
        %s145 = ssub.s32 %s12, 1
        %p146 = scmp.lt.s32.totalorder %s17, 1
        %s147 = scalar_select %p146, %s17, 1
        %s148 = smul.addr %s147, 8
        %s149 = smul.addr %s148, 8
        %s150 = scalar_lea.vmem %s0, %s149
        %p151 = pneg %p38
        %p152 = pneg %p35
        %p153 = pneg %p59
        %p154 = pneg %p56
        %p155 = pneg %p80
        %p156 = pneg %p77
        %p157 = pneg %p106
        %p158 = pneg %p103
        %s159 = sand.u32 %s93, 1
        %s160 = scalar_lea.sflag [#allocation3], %s159
        %s161 = sand.u32 %s93, 1
        %s162 = smul.addr %s161, 64
        %s163 = scalar_lea.vmem [#allocation2], %s162
        %p164 = scmp.lt.s32.totalorder %s17, 1
        %s165 = scalar_select %p164, %s17, 1
        %s166 = smul.addr %s165, 8
        %s167 = smul.addr %s166, 8
        %s168 = scalar_lea.vmem %s0, %s167
        %v169 = vld [vmem:[%s168] sm:$0xff]
        %v170 = vld [vmem:[%s168 + $0x8] sm:$0xff]
        %v171 = vld [vmem:[%s168 + $0x10] sm:$0xff]
        %v172 = vld [vmem:[%s168 + $0x18] sm:$0xff]
        %v173 = vld [vmem:[%s168 + $0x20] sm:$0xff]
        %v174 = vld [vmem:[%s168 + $0x28] sm:$0xff]
        %v175 = vld [vmem:[%s168 + $0x30] sm:$0xff]
        %v176 = vld [vmem:[%s168 + $0x38] sm:$0xff]
        %v177 = vld [vmem:[%s1] sm:$0xff]
        %v178 = vld [vmem:[%s1 + $0x8] sm:$0xff]
        %v179 = vld [vmem:[%s1 + $0x10] sm:$0xff]
        %v180 = vld [vmem:[%s1 + $0x18] sm:$0xff]
        %v181 = vld [vmem:[%s1 + $0x20] sm:$0xff]
        %v182 = vld [vmem:[%s1 + $0x28] sm:$0xff]
        %v183 = vld [vmem:[%s2] sm:$0xff]
        %v184 = vld [vmem:[%s2 + $0x8] sm:$0xff]
        %v185 = vld [vmem:[%s2 + $0x10] sm:$0xff]
        %v186 = vld [vmem:[%s2 + $0x18] sm:$0xff]
        %v187 = vld [vmem:[%s2 + $0x20] sm:$0xff]
        %v188 = vld [vmem:[%s2 + $0x28] sm:$0xff]
        %190 = vset.pattern.permute.xlu0 0
        %191 = vperm.xlu0 %190, %v183
        %v192 = vpop.permute.xlu0 %191
        %195 = vset.pattern.permute.xlu0 0
        %196 = vperm.xlu0 %195, %v184
        %v197 = vpop.permute.xlu0 %196
        %200 = vset.pattern.permute.xlu0 0
        %201 = vperm.xlu0 %200, %v185
        %v202 = vpop.permute.xlu0 %201
        %205 = vset.pattern.permute.xlu0 0
        %206 = vperm.xlu0 %205, %v186
        %v207 = vpop.permute.xlu0 %206
        %210 = vset.pattern.permute.xlu0 0
        %211 = vperm.xlu0 %210, %v187
        %v212 = vpop.permute.xlu0 %211
        %215 = vset.pattern.permute.xlu0 0
        %216 = vperm.xlu0 %215, %v188
        %v217 = vpop.permute.xlu0 %216
        %vm219 = vcmask 261120
        %v221 = vsel %vm219, %v177, 0
        %v224 = vsel %vm219, %v178, 0
        %v227 = vsel %vm219, %v179, 0
        %v230 = vsel %vm219, %v180, 0
        %v233 = vsel %vm219, %v181, 0
        %v236 = vsel %vm219, %v182, 0
        %238 = vmatprep.subr.mxu0 %v170
        %239 = vmatpush1.msra.mxu0 %v169
        %240 = vmatprep.subr.mxu0 %v172
        %241 = vmatpush1.msra.mxu0 %v171
        %242 = vmatprep.subr.mxu0 %v174
        %243 = vmatpush1.msra.mxu0 %v173
        %244 = vmatprep.subr.mxu0 %v176
        %245 = vmatpush1.msra.mxu0 %v175
        %246 = vmatprep.subr.mxu0 0.0
        %247 = vmatpush1.msra.mxu0 0.0
        %248 = vmatprep.subr.mxu0 0.0
        %249 = vmatpush1.msra.mxu0 0.0
        %250 = vmatprep.subr.mxu0 0.0
        %251 = vmatpush1.msra.mxu0 0.0
        %252 = vmatprep.subr.mxu0 0.0
        %253 = vmatpush1.msra.mxu0 0.0
        %254 = vmatprep.subr.mxu0 0.0
        %255 = vmatpush1.msra.mxu0 0.0
        %256 = vmatprep.subr.mxu0 0.0
        %257 = vmatpush1.msra.mxu0 0.0
        %258 = vmatprep.subr.mxu0 0.0
        %259 = vmatpush1.msra.mxu0 0.0
        %260 = vmatprep.subr.mxu0 0.0
        %261 = vmatpush1.msra.mxu0 0.0
        %262 = vmatprep.subr.mxu0 0.0
        %263 = vmatpush1.msra.mxu0 0.0
        %264 = vmatprep.subr.mxu0 0.0
        %265 = vmatpush1.msra.mxu0 0.0
        %266 = vmatprep.subr.mxu0 0.0
        %267 = vmatpush1.msra.mxu0 0.0
        %268 = vmatprep.subr.mxu0 0.0
        %269 = vmatpush1.msra.mxu0 0.0
        %270 = vmatprep.subr.mxu0 0.0
        %271 = vmatpush1.msra.mxu0 0.0
        %272 = vmatprep.subr.mxu0 0.0
        %273 = vmatpush1.msra.mxu0 0.0
        %274 = vmatprep.subr.mxu0 0.0
        %275 = vmatpush1.msra.mxu0 0.0
        %276 = vmatprep.subr.mxu0 0.0
        %277 = vmatpush1.msra.mxu0 0.0
        %278 = vmatprep.subr.mxu0 0.0
        %279 = vmatpush1.msra.mxu0 0.0
        %280 = vmatprep.subr.mxu0 0.0
        %281 = vmatpush1.msra.mxu0 0.0
        %282 = vmatprep.subr.mxu0 0.0
        %283 = vmatpush1.msra.mxu0 0.0
        %284 = vmatprep.subr.mxu0 0.0
        %285 = vmatpush1.msra.mxu0 0.0
        %286 = vmatprep.subr.mxu0 0.0
        %287 = vmatpush1.msra.mxu0 0.0
        %288 = vmatprep.subr.mxu0 0.0
        %289 = vmatpush1.msra.mxu0 0.0
        %290 = vmatprep.subr.mxu0 0.0
        %291 = vmatpush1.msra.mxu0 0.0
        %292 = vmatprep.subr.mxu0 0.0
        %293 = vmatpush1.msra.mxu0 0.0
        %294 = vmatprep.subr.mxu0 0.0
        %295 = vmatpush1.msra.mxu0 0.0
        %296 = vmatprep.subr.mxu0 0.0
        %297 = vmatpush1.msra.mxu0 0.0
        %298 = vmatprep.subr.mxu0 0.0
        %299 = vmatpush1.msra.mxu0 0.0
        %300 = vmatprep.subr.mxu0 0.0
        %301 = vmatpush1.msra.mxu0 0.0
        %302 = vmatprep.mubr.f32.mxu0 0.0
        %303 = vmatmul.mubr.f32.gmra.mrb[0].mxu0 %v221
        %v304 = vpop.f32.mrb[0].mxu0
        %v305 = vadd.f32 %v192, %v304
        %v306 = vpop.f32.mrb[0].mxu0
        %v307 = vadd.f32 %v192, %v306
        %308 = vmatprep.mubr.f32.mxu0 0.0
        %309 = vmatmul.mubr.f32.gmra.mrb[0].mxu0 %v224
        %v310 = vpop.f32.mrb[0].mxu0
        %v311 = vadd.f32 %v197, %v310
        %v312 = vpop.f32.mrb[0].mxu0
        %v313 = vadd.f32 %v197, %v312
        %314 = vmatprep.mubr.f32.mxu0 0.0
        %315 = vmatmul.mubr.f32.gmra.mrb[0].mxu0 %v227
        %v316 = vpop.f32.mrb[0].mxu0
        %v317 = vadd.f32 %v202, %v316
        %v318 = vpop.f32.mrb[0].mxu0
        %v319 = vadd.f32 %v202, %v318
        %320 = vmatprep.mubr.f32.mxu0 0.0
        %321 = vmatmul.mubr.f32.gmra.mrb[0].mxu0 %v230
        %v322 = vpop.f32.mrb[0].mxu0
        %v323 = vadd.f32 %v207, %v322
        %v324 = vpop.f32.mrb[0].mxu0
        %v325 = vadd.f32 %v207, %v324
        %326 = vmatprep.mubr.f32.mxu0 0.0
        %327 = vmatmul.mubr.f32.gmra.mrb[0].mxu0 %v233
        %v328 = vpop.f32.mrb[0].mxu0
        %v329 = vadd.f32 %v212, %v328
        %v330 = vpop.f32.mrb[0].mxu0
        %v331 = vadd.f32 %v212, %v330
        %332 = vmatprep.mubr.f32.mxu0 0.0
        %333 = vmatmul.mubr.f32.gmra.mrb[0].mxu0 %v236
        %v334 = vpop.f32.mrb[0].mxu0
        %v335 = vadd.f32 %v217, %v334
        %v336 = vpop.f32.mrb[0].mxu0
        %v337 = vadd.f32 %v217, %v336
        %338 = vdwg.mxu0
        %v339 = vmul.f32 %v305, %v305
        %v340 = vmul.f32 %v307, %v307
        %v341 = vrot.slane %v339, 4
        %v342 = vadd.f32 %v339, %v341
        %v343 = vrot.slane %v342, 2
        %v344 = vadd.f32 %v342, %v343
        %v345 = vrot.slane %v344, 1
        %v346 = vadd.f32 %v344, %v345
        %v347 = vrot.slane %v340, 4
        %v348 = vadd.f32 %v340, %v347
        %v349 = vrot.slane %v348, 2
        %v350 = vadd.f32 %v348, %v349
        %v351 = vrot.slane %v350, 1
        %v352 = vadd.f32 %v350, %v351
        %v353 = vrsqrt.pop %v346
        %v354 = vrsqrt.pop %v352
        %v355 = vmul.f32 %v305, %v353
        %v356 = vmul.f32 %v307, %v354
        %v357 = vmul.f32 %v311, %v311
        %v358 = vmul.f32 %v313, %v313
        %v359 = vrot.slane %v357, 4
        %v360 = vadd.f32 %v357, %v359
        %v361 = vrot.slane %v360, 2
        %v362 = vadd.f32 %v360, %v361
        %v363 = vrot.slane %v362, 1
        %v364 = vadd.f32 %v362, %v363
        %v365 = vrot.slane %v358, 4
        %v366 = vadd.f32 %v358, %v365
        %v367 = vrot.slane %v366, 2
        %v368 = vadd.f32 %v366, %v367
        %v369 = vrot.slane %v368, 1
        %v370 = vadd.f32 %v368, %v369
        %v371 = vrsqrt.pop %v364
        %v372 = vrsqrt.pop %v370
        %v373 = vmul.f32 %v311, %v371
        %v374 = vmul.f32 %v313, %v372
        %v375 = vadd.f32 %v373, %v374
        %376 = vadd.xlane.f32.xlu0 %v375
        %v377 = vpop.xlane.xlu0 %376
        %v378 = vadd.f32 %v377, 1e-06
        %v379 = vmul.f32 %v355, %v378
        %v380 = vmul.f32 %v356, %v378
        %v381 = vrot.slane %v379, 4
        %v382 = vadd.f32 %v379, %v381
        %v383 = vrot.slane %v382, 2
        %v384 = vadd.f32 %v382, %v383
        %v385 = vrot.slane %v384, 1
        %v386 = vadd.f32 %v384, %v385
        %v387 = vrot.slane %v380, 4
        %v388 = vadd.f32 %v380, %v387
        %v389 = vrot.slane %v388, 2
        %v390 = vadd.f32 %v388, %v389
        %v391 = vrot.slane %v390, 1
        %v392 = vadd.f32 %v390, %v391
        %v393 = vadd.f32 %v386, 256.0
        %v394 = vadd.f32 %v392, 256.0
        %v395 = vrcp.pop %v393
        %v396 = vrcp.pop %v394
        %v397 = vadd.f32 %v317, %v319
        %398 = vadd.xlane.f32.xlu0 %v397
        %v399 = vpop.xlane.xlu0 %398
        %v400 = vadd.f32 %v323, %v325
        %401 = vadd.xlane.f32.xlu0 %v400
        %v402 = vpop.xlane.xlu0 %401
        %v403 = vadd.f32 %v329, %v331
        %404 = vadd.xlane.f32.xlu0 %v403
        %v405 = vpop.xlane.xlu0 %404
        %v406 = vadd.f32 %v335, %v337
        %407 = vadd.xlane.f32.xlu0 %v406
        %v408 = vpop.xlane.xlu0 %407
        %409 = vmatprep.subr.mxu0 %v374
        %410 = vmatpush1.xpose.msra.mxu0 %v373
        %411 = vmatprep.subr.mxu0 0.0
        %412 = vmatpush1.xpose.msra.mxu0 0.0
        %413 = vmatprep.subr.mxu0 0.0
        %414 = vmatpush1.xpose.msra.mxu0 0.0
        %415 = vmatprep.subr.mxu0 0.0
        %416 = vmatpush1.xpose.msra.mxu0 0.0
        %417 = vmatprep.subr.mxu0 0.0
        %418 = vmatpush1.xpose.msra.mxu0 0.0
        %419 = vmatprep.subr.mxu0 0.0
        %420 = vmatpush1.xpose.msra.mxu0 0.0
        %421 = vmatprep.subr.mxu0 0.0
        %422 = vmatpush1.xpose.msra.mxu0 0.0
        %423 = vmatprep.subr.mxu0 0.0
        %424 = vmatpush1.xpose.msra.mxu0 0.0
        %425 = vmatprep.subr.mxu0 0.0
        %426 = vmatpush1.xpose.msra.mxu0 0.0
        %427 = vmatprep.subr.mxu0 0.0
        %428 = vmatpush1.xpose.msra.mxu0 0.0
        %429 = vmatprep.subr.mxu0 0.0
        %430 = vmatpush1.xpose.msra.mxu0 0.0
        %431 = vmatprep.subr.mxu0 0.0
        %432 = vmatpush1.xpose.msra.mxu0 0.0
        %433 = vmatprep.subr.mxu0 0.0
        %434 = vmatpush1.xpose.msra.mxu0 0.0
        %435 = vmatprep.subr.mxu0 0.0
        %436 = vmatpush1.xpose.msra.mxu0 0.0
        %437 = vmatprep.subr.mxu0 0.0
        %438 = vmatpush1.xpose.msra.mxu0 0.0
        %439 = vmatprep.subr.mxu0 0.0
        %440 = vmatpush1.xpose.msra.mxu0 0.0
        %441 = vmatprep.subr.mxu0 0.0
        %442 = vmatpush1.xpose.msra.mxu0 0.0
        %443 = vmatprep.subr.mxu0 0.0
        %444 = vmatpush1.xpose.msra.mxu0 0.0
        %445 = vmatprep.subr.mxu0 0.0
        %446 = vmatpush1.xpose.msra.mxu0 0.0
        %447 = vmatprep.subr.mxu0 0.0
        %448 = vmatpush1.xpose.msra.mxu0 0.0
        %449 = vmatprep.subr.mxu0 0.0
        %450 = vmatpush1.xpose.msra.mxu0 0.0
        %451 = vmatprep.subr.mxu0 0.0
        %452 = vmatpush1.xpose.msra.mxu0 0.0
        %453 = vmatprep.subr.mxu0 0.0
        %454 = vmatpush1.xpose.msra.mxu0 0.0
        %455 = vmatprep.subr.mxu0 0.0
        %456 = vmatpush1.xpose.msra.mxu0 0.0
        %457 = vmatprep.subr.mxu0 0.0
        %458 = vmatpush1.xpose.msra.mxu0 0.0
        %459 = vmatprep.subr.mxu0 0.0
        %460 = vmatpush1.xpose.msra.mxu0 0.0
        %461 = vmatprep.subr.mxu0 0.0
        %462 = vmatpush1.xpose.msra.mxu0 0.0
        %463 = vmatprep.subr.mxu0 0.0
        %464 = vmatpush1.xpose.msra.mxu0 0.0
        %465 = vmatprep.subr.mxu0 0.0
        %466 = vmatpush1.xpose.msra.mxu0 0.0
        %467 = vmatprep.subr.mxu0 0.0
        %468 = vmatpush1.xpose.msra.mxu0 0.0
        %469 = vmatprep.subr.mxu0 0.0
        %470 = vmatpush1.xpose.msra.mxu0 0.0
        %471 = vmatprep.subr.mxu0 0.0
        %472 = vmatpush1.xpose.msra.mxu0 0.0
        %473 = vmatprep.mubr.f32.mxu0 %v319
        %474 = vmatmul.mubr.f32.gmra.mrb[0].mxu0 %v317
        %v475 = vpop.f32.mrb[0].mxu0
        %v476 = vadd.f32 0.0, %v475
        %v477 = vpop.f32.mrb[0].mxu0
        %478 = vmatprep.mubr.f32.mxu0 %v325
        %479 = vmatmul.mubr.f32.gmra.mrb[0].mxu0 %v323
        %v480 = vpop.f32.mrb[0].mxu0
        %v481 = vadd.f32 0.0, %v480
        %v482 = vpop.f32.mrb[0].mxu0
        %483 = vmatprep.mubr.f32.mxu0 %v331
        %484 = vmatmul.mubr.f32.gmra.mrb[0].mxu0 %v329
        %v485 = vpop.f32.mrb[0].mxu0
        %v486 = vadd.f32 0.0, %v485
        %v487 = vpop.f32.mrb[0].mxu0
        %488 = vmatprep.mubr.f32.mxu0 %v337
        %489 = vmatmul.mubr.f32.gmra.mrb[0].mxu0 %v335
        %v490 = vpop.f32.mrb[0].mxu0
        %v491 = vadd.f32 0.0, %v490
        %v492 = vpop.f32.mrb[0].mxu0
        %493 = vdwg.mxu0
        %vm494 = vcmask 64512
        %v496 = vsel %vm494, %v476, 0
        %v499 = vsel %vm494, %v481, 0
        %v502 = vsel %vm494, %v486, 0
        %v505 = vsel %vm494, %v491, 0
        %507 = vmatprep.subr.mxu0 %v356
        %508 = vmatpush1.msra.mxu0 %v355
        %509 = vmatprep.subr.mxu0 0.0
        %510 = vmatpush1.msra.mxu0 0.0
        %511 = vmatprep.subr.mxu0 0.0
        %512 = vmatpush1.msra.mxu0 0.0
        %513 = vmatprep.subr.mxu0 0.0
        %514 = vmatpush1.msra.mxu0 0.0
        %515 = vmatprep.subr.mxu0 0.0
        %516 = vmatpush1.msra.mxu0 0.0
        %517 = vmatprep.subr.mxu0 0.0
        %518 = vmatpush1.msra.mxu0 0.0
        %519 = vmatprep.subr.mxu0 0.0
        %520 = vmatpush1.msra.mxu0 0.0
        %521 = vmatprep.subr.mxu0 0.0
        %522 = vmatpush1.msra.mxu0 0.0
        %523 = vmatprep.subr.mxu0 0.0
        %524 = vmatpush1.msra.mxu0 0.0
        %525 = vmatprep.subr.mxu0 0.0
        %526 = vmatpush1.msra.mxu0 0.0
        %527 = vmatprep.subr.mxu0 0.0
        %528 = vmatpush1.msra.mxu0 0.0
        %529 = vmatprep.subr.mxu0 0.0
        %530 = vmatpush1.msra.mxu0 0.0
        %531 = vmatprep.subr.mxu0 0.0
        %532 = vmatpush1.msra.mxu0 0.0
        %533 = vmatprep.subr.mxu0 0.0
        %534 = vmatpush1.msra.mxu0 0.0
        %535 = vmatprep.subr.mxu0 0.0
        %536 = vmatpush1.msra.mxu0 0.0
        %537 = vmatprep.subr.mxu0 0.0
        %538 = vmatpush1.msra.mxu0 0.0
        %539 = vmatprep.subr.mxu0 0.0
        %540 = vmatpush1.msra.mxu0 0.0
        %541 = vmatprep.subr.mxu0 0.0
        %542 = vmatpush1.msra.mxu0 0.0
        %543 = vmatprep.subr.mxu0 0.0
        %544 = vmatpush1.msra.mxu0 0.0
        %545 = vmatprep.subr.mxu0 0.0
        %546 = vmatpush1.msra.mxu0 0.0
        %547 = vmatprep.subr.mxu0 0.0
        %548 = vmatpush1.msra.mxu0 0.0
        %549 = vmatprep.subr.mxu0 0.0
        %550 = vmatpush1.msra.mxu0 0.0
        %551 = vmatprep.subr.mxu0 0.0
        %552 = vmatpush1.msra.mxu0 0.0
        %553 = vmatprep.subr.mxu0 0.0
        %554 = vmatpush1.msra.mxu0 0.0
        %555 = vmatprep.subr.mxu0 0.0
        %556 = vmatpush1.msra.mxu0 0.0
        %557 = vmatprep.subr.mxu0 0.0
        %558 = vmatpush1.msra.mxu0 0.0
        %559 = vmatprep.subr.mxu0 0.0
        %560 = vmatpush1.msra.mxu0 0.0
        %561 = vmatprep.subr.mxu0 0.0
        %562 = vmatpush1.msra.mxu0 0.0
        %563 = vmatprep.subr.mxu0 0.0
        %564 = vmatpush1.msra.mxu0 0.0
        %565 = vmatprep.subr.mxu0 0.0
        %566 = vmatpush1.msra.mxu0 0.0
        %567 = vmatprep.subr.mxu0 0.0
        %568 = vmatpush1.msra.mxu0 0.0
        %569 = vmatprep.subr.mxu0 0.0
        %570 = vmatpush1.msra.mxu0 0.0
        %571 = vmatprep.mubr.f32.mxu0 0.0
        %572 = vmatmul.mubr.f32.gmra.mrb[0].mxu0 %v496
        %v573 = vpop.f32.mrb[0].mxu0
        %v574 = vadd.f32 0.0, %v573
        %v575 = vpop.f32.mrb[0].mxu0
        %v576 = vadd.f32 0.0, %v575
        %577 = vmatprep.mubr.f32.mxu0 0.0
        %578 = vmatmul.mubr.f32.gmra.mrb[0].mxu0 %v499
        %v579 = vpop.f32.mrb[0].mxu0
        %v580 = vadd.f32 0.0, %v579
        %v581 = vpop.f32.mrb[0].mxu0
        %v582 = vadd.f32 0.0, %v581
        %583 = vmatprep.mubr.f32.mxu0 0.0
        %584 = vmatmul.mubr.f32.gmra.mrb[0].mxu0 %v502
        %v585 = vpop.f32.mrb[0].mxu0
        %v586 = vadd.f32 0.0, %v585
        %v587 = vpop.f32.mrb[0].mxu0
        %v588 = vadd.f32 0.0, %v587
        %589 = vmatprep.mubr.f32.mxu0 0.0
        %590 = vmatmul.mubr.f32.gmra.mrb[0].mxu0 %v505
        %v591 = vpop.f32.mrb[0].mxu0
        %v592 = vadd.f32 0.0, %v591
        %v593 = vpop.f32.mrb[0].mxu0
        %v594 = vadd.f32 0.0, %v593
        %595 = vdwg.mxu0
        %v596 = vadd.f32 %v399, %v574
        %v597 = vadd.f32 %v399, %v576
        %v598 = vadd.f32 %v402, %v580
        %v599 = vadd.f32 %v402, %v582
        %v600 = vadd.f32 %v405, %v586
        %v601 = vadd.f32 %v405, %v588
        %v602 = vadd.f32 %v408, %v592
        %v603 = vadd.f32 %v408, %v594
        %v604 = vmul.f32 %v596, %v395
        %v605 = vmul.f32 %v597, %v396
        %v606 = vmul.f32 %v598, %v395
        %v607 = vmul.f32 %v599, %v396
        %v608 = vmul.f32 %v600, %v395
        %v609 = vmul.f32 %v601, %v396
        %v610 = vmul.f32 %v602, %v395
        %v611 = vmul.f32 %v603, %v396
        %612 = vst [vmem:[%s163] sm:$0xff] %v604
        %613 = vst [vmem:[%s163 + $0x8] sm:$0xff] %v605
        %614 = vst [vmem:[%s163 + $0x10] sm:$0xff] %v606
        %615 = vst [vmem:[%s163 + $0x18] sm:$0xff] %v607
        %616 = vst [vmem:[%s163 + $0x20] sm:$0xff] %v608
        %617 = vst [vmem:[%s163 + $0x28] sm:$0xff] %v609
        %618 = vst [vmem:[%s163 + $0x30] sm:$0xff] %v610
        %619 = vst [vmem:[%s163 + $0x38] sm:$0xff] %v611
        %s620 = sand.u32 %s93, 1
        %s621 = scalar_lea.sflag [#allocation3], %s620
        %s622 = sand.u32 %s93, 1
        %s623 = smul.addr %s622, 64
        %s624 = scalar_lea.vmem [#allocation2], %s623
        // Predicated region
        $region33: #{tpu_custom_call.1} parent=31 // pred_check
          %p625 = pneg %p103
        $region34: #{tpu_custom_call.1} parent=31 // pred_check_branch
          %627 = sbr.rel (%p625) target = $region36
        $region35: #{tpu_custom_call.1} parent=31 // pred_region
          %s629 = ssub.s32 1024, 1024
          %630 = vsyncadd %s621, %s629
          %s631 = smul.addr %s17, 8
          %s632 = smul.addr %s631, 128
          %s633 = scalar_lea.hbm %s3, %s632
          %s634 = sshll.u32 %s624, 4
          %s635 = int_to_ptr.vmem [resolvable:$true] %s634
          %640 = dma.vmem_to_hbm [thread:$0]  %s635, 1024, %s633, %s621, 256, 256, 16
        $region36: #{tpu_custom_call.1} parent=31 // pred_fallthru
          _
      $region32: #{tpu_custom_call.1} parent=5 // pred_fallthru
        _
      %p641 = scmp.le.s32.totalorder 2, %s12
      // Predicated region
      $region37: #{tpu_custom_call.1} parent=5 // pred_check
        %p642 = pneg %p641
      $region38: #{tpu_custom_call.1} parent=5 // pred_check_branch
        %644 = sbr.rel (%p642) target = $region40
      $region39: #{tpu_custom_call.1} parent=5 // pred_region
        %s645 = ssub.s32 %s12, 2
        // Predicated region
        $region41: #{tpu_custom_call.1} parent=39 // pred_check
          %p646 = pneg %p109
        $region42: #{tpu_custom_call.1} parent=39 // pred_check_branch
          %648 = sbr.rel (%p646) target = $region44
        $region43: #{tpu_custom_call.1} parent=39 // pred_region
          %s649 = sand.u32 %s94, 1
          %s650 = scalar_lea.sflag [#allocation3], %s649
          %s651 = sand.u32 %s94, 1
          %s652 = smul.addr %s651, 64
          %s653 = scalar_lea.vmem [#allocation2], %s652
          %654 = dma.done %s650, 1024
        $region44: #{tpu_custom_call.1} parent=39 // pred_fallthru
          _
      $region40: #{tpu_custom_call.1} parent=5 // pred_fallthru
        _
    $region6: #{tpu_custom_call.1} parent=1 // loop_footer
      %s16 = sadd.s32 1, %s12
    $region7: #{tpu_custom_call.1} parent=1 // loop_footer_branch
      %11 = sbr.rel target = $region3
    $region8: #{tpu_custom_call.1} parent=1 // loop_exit
      _
    %655 = vsyncpa [#allocation3], 1
    %s656 = scalar_lea.sflag [#allocation3], 1
    %657 = vsyncpa %s656, 1

</llo_original>
